<compile_context>
chip_gen: v7x
topology: tpu7x:2x2x1
jax: 0.10.0
libtpu: 0.0.40
codegen_flags: <defaults>
</compile_context>

<pallas_src>
import math
import jax
import jax.numpy as jnp
from jax.experimental import pallas as pl
from jax.experimental.pallas import tpu as pltpu


def _round_up(x, m):
    return (x + m - 1) // m * m


def _vmem_capacity_bytes():
    """Physical VMEM per TensorCore; conservative 64 MiB (v7x) fallback."""
    try:
        info = pltpu.get_tpu_info()
        for attr in ("vmem_capacity_bytes", "vmem_size_bytes", "vmem_bytes"):
            v = getattr(info, attr, None)
            if v:
                return int(v)
    except Exception:
        pass
    return 64 << 20


def _projhead_kernel(x_ref, w1_ref, b1_ref, w2_ref, b2_ref, o_ref):
    # Linear 1 on the MXU with f32 accumulation; bias + ReLU in f32 on the VPU.
    h = jnp.dot(x_ref[...], w1_ref[...], preferred_element_type=jnp.float32)
    h = jnp.maximum(h + b1_ref[...].astype(jnp.float32), 0.0)
    # Feed the second matmul in the weight dtype (bf16 weights -> bf16 MXU path).
    h = h.astype(w2_ref.dtype)
    # Linear 2 on the MXU with f32 accumulation; bias in f32.
    y = jnp.dot(h, w2_ref[...], preferred_element_type=jnp.float32)
    y = y + b2_ref[...].astype(jnp.float32)
    o_ref[...] = y.astype(o_ref.dtype)


def pad_proj_head_params(w1, b1, w2, b2):
    """Zero-pad the hidden axis to a multiple of 128 (lane-dense W1 columns /
    W2 rows).  Call once at parameter-init time so the pads stay off the hot
    path.  Padded hidden units have weight 0 and bias 0, ReLU(0) = 0, so they
    contribute exactly 0 to the output -> semantics preserved."""
    hid = w1.shape[1]
    hid_p = _round_up(hid, 128)
    if hid_p == hid:
        return w1, b1, w2, b2
    p = hid_p - hid
    return (
        jnp.pad(w1, ((0, 0), (0, p))),
        jnp.pad(b1, ((0, 0), (0, p))),
        jnp.pad(w2, ((0, p), (0, 0))),
        b2,
    )


def _bspec(shape, index_map, mode):
    if mode is None:
        return pl.BlockSpec(shape, index_map)
    return pl.BlockSpec(shape, index_map, pipeline_mode=mode)


# Resolved on the first proj_head call: whether this JAX version accepts
# pipeline_mode=pl.Buffered(1) on resident-weight BlockSpecs.
_WEIGHT_SINGLE_BUFFER_OK = None


def proj_head(feat, w1, b1, w2, b2, *, row_tile=None, stream_buffers=2,
              compute_dtype=None):
    """ProjHead forward: ReLU(feat @ w1 + b1) @ w2 + b2.

    feat: (N, feat_dim); w1: (feat_dim, hidden[_padded]); b1: (1, hidden[_padded]);
    w2: (hidden[_padded], head_dim); b2: (1, head_dim).  Returns (N, head_dim).

    Prefer padding the params once with pad_proj_head_params(); if the hidden
    axis is not already a multiple of 128 it is padded here as a fallback.
    On v5e, compute_dtype=jnp.bfloat16 gives ~3x MXU throughput and halves
    weight HBM traffic (f32 accumulation is kept via preferred_element_type).
    stream_buffers > 2 deepens pipelining of the streamed x/out tiles (use if a
    profile shows exposed DMA, e.g. small hidden_dim on v7x).
    """
    global _WEIGHT_SINGLE_BUFFER_OK

    if compute_dtype is not None:
        feat = feat.astype(compute_dtype)
        w1, b1, w2, b2 = (t.astype(compute_dtype) for t in (w1, b1, w2, b2))
    if w1.shape[1] % 128 != 0:  # hot-path fallback; prefer pad_proj_head_params at init
        w1, b1, w2, b2 = pad_proj_head_params(w1, b1, w2, b2)

    n, feat_dim = feat.shape
    hid_p = w1.shape[1]
    head_dim = w2.shape[1]
    dtype = feat.dtype
    itm = jnp.dtype(dtype).itemsize
    sub = max(8, 32 // itm)  # sublane packing: 8 rows f32, 16 bf16, 32 int8

    cap = _vmem_capacity_bytes()

    # ---- Row tile selection ------------------------------------------------
    # Resident weights (single-buffered) + per-row streamed bytes decide how
    # large the row tile can be; larger tiles amortize per-grid-step overhead.
    weights_bytes = itm * (feat_dim * hid_p + hid_p + hid_p * head_dim + head_dim)
    per_row = stream_buffers * itm * feat_dim + 2 * itm * head_dim + 4 * hid_p
    if row_tile is None:
        row_tile = 1024 if cap >= (96 << 20) else 512
        budget = int(0.6 * cap) - 2 * weights_bytes  # worst case: double-buffered weights
        while row_tile > 128 and row_tile * per_row > budget:
            row_tile //= 2

    if n <= sub:
        tm = n                                  # single block; full-dim is exempt
    elif n <= row_tile:
        tm = _round_up(pl.cdiv(n, 2), sub)      # >=2 grid steps -> both v7x TCs busy
    else:
        tm = row_tile
    grid = (pl.cdiv(n, tm),)  # ragged last block: OOB rows clipped on load/store

    flops = 2 * n * (feat_dim * hid_p + hid_p * head_dim)
    bytes_accessed = itm * (n * feat_dim + n * head_dim) + weights_bytes

    def build(single_buffer_weights):
        w_bufs = 1 if single_buffer_weights else 2
        w_mode = pl.Buffered(1) if single_buffer_weights else None
        x_mode = (pl.Buffered(stream_buffers)
                  if (single_buffer_weights and stream_buffers != 2) else None)
        vmem_need = w_bufs * weights_bytes + tm * per_row
        # ~80% of physical VMEM leaves headroom for Mosaic internal scratch and
        # the f32 hidden intermediate (=> ~51 MiB on v7x, ~102 MiB on v5e/v6e).
        vmem_limit = int(min(0.8 * cap, max(32 << 20, 2 * vmem_need)))
        return pl.pallas_call(
            _projhead_kernel,
            out_shape=jax.ShapeDtypeStruct((n, head_dim), dtype),
            grid_spec=pltpu.PrefetchScalarGridSpec(
                num_scalar_prefetch=0,
                grid=grid,
                in_specs=[
                    # Streamed row tile; last dim == full feat_dim -> no padded copy of x.
                    _bspec((tm, feat_dim), lambda i: (i, 0), x_mode),
                    # Weights/biases: constant index_map -> VMEM-resident across the grid.
                    _bspec((feat_dim, hid_p), lambda i: (0, 0), w_mode),
                    _bspec((1, hid_p), lambda i: (0, 0), w_mode),
                    _bspec((hid_p, head_dim), lambda i: (0, 0), w_mode),
                    _bspec((1, head_dim), lambda i: (0, 0), w_mode),
                ],
                out_specs=_bspec((tm, head_dim), lambda i: (i, 0), x_mode),
            ),
            compiler_params=pltpu.CompilerParams(
                dimension_semantics=("parallel",),
                vmem_limit_bytes=vmem_limit,
            ),
            cost_estimate=pl.CostEstimate(
                flops=flops, transcendentals=0, bytes_accessed=bytes_accessed),
        )

    # TODO(synk): add a K-tiled variant (reduction grid axis over feat_dim, f32
    # accumulator scratch + pl.when init/finalize) for ProjHead configs whose W1
    # no longer fits single-buffered in VMEM (hits v7x's 64 MiB first).

    if _WEIGHT_SINGLE_BUFFER_OK is None:
        try:
            out = build(True)(feat, w1, b1, w2, b2)
            jax.block_until_ready(out)
            _WEIGHT_SINGLE_BUFFER_OK = True
            return out
        except Exception:
            # pipeline_mode / Buffered(1) rejected by this JAX version: fall back
            # to default double-buffered pipelining (budget already accounts for it).
            _WEIGHT_SINGLE_BUFFER_OK = False
    return build(_WEIGHT_SINGLE_BUFFER_OK)(feat, w1, b1, w2, b2)


def init_proj_head_params(key, feat_dim, hidden_dim, head_dim, dtype=jnp.float32):
    """Mimics PyTorch nn.Linear default init: U(-1/sqrt(fan_in), 1/sqrt(fan_in)).
    Weights stored (in, out) = transpose of PyTorch's (out, in)."""
    k1, k2, k3, k4 = jax.random.split(key, 4)
    bound1 = 1.0 / math.sqrt(feat_dim)
    bound2 = 1.0 / math.sqrt(hidden_dim)
    w1 = jax.random.uniform(k1, (feat_dim, hidden_dim), dtype, -bound1, bound1)
    b1 = jax.random.uniform(k2, (1, hidden_dim), dtype, -bound1, bound1)
    w2 = jax.random.uniform(k3, (hidden_dim, head_dim), dtype, -bound2, bound2)
    b2 = jax.random.uniform(k4, (1, head_dim), dtype, -bound2, bound2)
    return w1, b1, w2, b2


if __name__ == "__main__":
    # Small shapes consistent with ProjHead(feat_dim, hidden_dim, head_dim)
    N, FEAT_DIM, HIDDEN_DIM, HEAD_DIM = 8, 32, 64, 16

    key = jax.random.PRNGKey(0)
    k_feat, k_params = jax.random.split(key)
    feat = jax.random.normal(k_feat, (N, FEAT_DIM), dtype=jnp.float32)
    w1, b1, w2, b2 = init_proj_head_params(k_params, FEAT_DIM, HIDDEN_DIM, HEAD_DIM)

    # Hoist the hidden-axis weight padding out of the hot path (done once).
    w1_p, b1_p, w2_p, b2_p = pad_proj_head_params(w1, b1, w2, b2)

    out = proj_head(feat, w1_p, b1_p, w2_p, b2_p)
    jax.block_until_ready(out)

    # Pure-JAX reference check against the unpadded parameters.
    ref = jnp.maximum(feat @ w1 + b1, 0.0) @ w2 + b2
    assert out.shape == (N, HEAD_DIM)
    assert jnp.allclose(out, ref, atol=1e-5, rtol=1e-5)

    print("KERNEL_OK")
</pallas_src>

<mosaic_0001>
module attributes {stable_mosaic.version = 11 : i64} {
  func.func @_projhead_kernel(%arg0: i32, %arg1: memref<8x32xf32, #tpu.memory_space<vmem>>, %arg2: memref<32x128xf32, #tpu.memory_space<vmem>>, %arg3: memref<1x128xf32, #tpu.memory_space<vmem>>, %arg4: memref<128x16xf32, #tpu.memory_space<vmem>>, %arg5: memref<1x16xf32, #tpu.memory_space<vmem>>, %arg6: memref<8x16xf32, #tpu.memory_space<vmem>>) attributes {dimension_semantics = [#tpu.dimension_semantics<parallel>], iteration_bounds = array<i64: 1>, scalar_prefetch = 0 : i64, scratch_operands = 0 : i64, tpu.core_type = #tpu.core_type<tc>, window_params = [{transform_indices = @transform_0, window_bounds = array<i64: 8, 32>}, {pipeline_mode = #tpu.pipeline_mode<synchronous>, transform_indices = @transform_1, window_bounds = array<i64: 32, 128>}, {pipeline_mode = #tpu.pipeline_mode<synchronous>, transform_indices = @transform_2, window_bounds = array<i64: 1, 128>}, {pipeline_mode = #tpu.pipeline_mode<synchronous>, transform_indices = @transform_3, window_bounds = array<i64: 128, 16>}, {pipeline_mode = #tpu.pipeline_mode<synchronous>, transform_indices = @transform_4, window_bounds = array<i64: 1, 16>}, {transform_indices = @transform_5, window_bounds = array<i64: 8, 16>}]} {
    %c0 = arith.constant 0 : index
    %c0_0 = arith.constant 0 : index
    %0 = vector.load %arg1[%c0, %c0_0] : memref<8x32xf32, #tpu.memory_space<vmem>>, vector<8x32xf32>
    %c0_1 = arith.constant 0 : index
    %c0_2 = arith.constant 0 : index
    %1 = vector.load %arg2[%c0_1, %c0_2] : memref<32x128xf32, #tpu.memory_space<vmem>>, vector<32x128xf32>
    %cst = arith.constant dense<0.000000e+00> : vector<8x128xf32>
    %2 = tpu.matmul %0, %1, %cst {dimension_numbers = #tpu.dot_dimension_numbers<[1], [0], [0], [1], [0, 0, 1, 1], [], []>} : vector<8x32xf32>, vector<32x128xf32>, vector<8x128xf32> -> vector<8x128xf32>
    %c0_3 = arith.constant 0 : index
    %c0_4 = arith.constant 0 : index
    %3 = vector.load %arg3[%c0_3, %c0_4] : memref<1x128xf32, #tpu.memory_space<vmem>>, vector<1x128xf32>
    %4 = vector.broadcast %3 : vector<1x128xf32> to vector<8x128xf32>
    %5 = arith.addf %2, %4 : vector<8x128xf32>
    %cst_5 = arith.constant 0.000000e+00 : f32
    %6 = vector.broadcast %cst_5 : f32 to vector<8x128xf32>
    %7 = arith.maximumf %5, %6 : vector<8x128xf32>
    %c0_6 = arith.constant 0 : index
    %c0_7 = arith.constant 0 : index
    %8 = vector.load %arg4[%c0_6, %c0_7] : memref<128x16xf32, #tpu.memory_space<vmem>>, vector<128x16xf32>
    %cst_8 = arith.constant dense<0.000000e+00> : vector<8x16xf32>
    %9 = tpu.matmul %7, %8, %cst_8 {dimension_numbers = #tpu.dot_dimension_numbers<[1], [0], [0], [1], [0, 0, 1, 1], [], []>} : vector<8x128xf32>, vector<128x16xf32>, vector<8x16xf32> -> vector<8x16xf32>
    %c0_9 = arith.constant 0 : index
    %c0_10 = arith.constant 0 : index
    %10 = vector.load %arg5[%c0_9, %c0_10] : memref<1x16xf32, #tpu.memory_space<vmem>>, vector<1x16xf32>
    %11 = vector.broadcast %10 : vector<1x16xf32> to vector<8x16xf32>
    %12 = arith.addf %9, %11 : vector<8x16xf32>
    %c0_11 = arith.constant 0 : index
    %c0_12 = arith.constant 0 : index
    %13 = vector.load %arg6[%c0_11, %c0_12] : memref<8x16xf32, #tpu.memory_space<vmem>>, vector<8x16xf32>
    tpu.vector_store %arg6[%c0_11, %c0_12], %12 {strides = array<i32>} : memref<8x16xf32, #tpu.memory_space<vmem>>, vector<8x16xf32>,
    return
  }
  func.func @transform_0(%arg0: i32) -> (i32, i32) {
    %c0_i32 = arith.constant 0 : i32
    %c0_i32_0 = arith.constant 0 : i32
    return %arg0, %c0_i32 : i32, i32
  }
  func.func @transform_1(%arg0: i32) -> (i32, i32) {
    %c0_i32 = arith.constant 0 : i32
    %c0_i32_0 = arith.constant 0 : i32
    %c0_i32_1 = arith.constant 0 : i32
    return %c0_i32, %c0_i32_0 : i32, i32
  }
  func.func @transform_2(%arg0: i32) -> (i32, i32) {
    %c0_i32 = arith.constant 0 : i32
    %c0_i32_0 = arith.constant 0 : i32
    %c0_i32_1 = arith.constant 0 : i32
    return %c0_i32, %c0_i32_0 : i32, i32
  }
  func.func @transform_3(%arg0: i32) -> (i32, i32) {
    %c0_i32 = arith.constant 0 : i32
    %c0_i32_0 = arith.constant 0 : i32
    %c0_i32_1 = arith.constant 0 : i32
    return %c0_i32, %c0_i32_0 : i32, i32
  }
  func.func @transform_4(%arg0: i32) -> (i32, i32) {
    %c0_i32 = arith.constant 0 : i32
    %c0_i32_0 = arith.constant 0 : i32
    %c0_i32_1 = arith.constant 0 : i32
    return %c0_i32, %c0_i32_0 : i32, i32
  }
  func.func @transform_5(%arg0: i32) -> (i32, i32) {
    %c0_i32 = arith.constant 0 : i32
    %c0_i32_0 = arith.constant 0 : i32
    return %arg0, %c0_i32 : i32, i32
  }
}

module attributes {stable_mosaic.version = 11 : i64} {
  func.func @_projhead_kernel(%arg0: i32, %arg1: memref<8x32xf32, #tpu.memory_space<vmem>>, %arg2: memref<32x128xf32, #tpu.memory_space<vmem>>, %arg3: memref<1x128xf32, #tpu.memory_space<vmem>>, %arg4: memref<128x16xf32, #tpu.memory_space<vmem>>, %arg5: memref<1x16xf32, #tpu.memory_space<vmem>>, %arg6: memref<8x16xf32, #tpu.memory_space<vmem>>) attributes {dimension_semantics = [#tpu.dimension_semantics<parallel>], iteration_bounds = array<i64: 1>, scalar_prefetch = 0 : i64, scratch_operands = 0 : i64, tpu.core_type = #tpu.core_type<tc>, window_params = [{transform_indices = @transform_0, window_bounds = array<i64: 8, 32>}, {pipeline_mode = #tpu.pipeline_mode<synchronous>, transform_indices = @transform_1, window_bounds = array<i64: 32, 128>}, {pipeline_mode = #tpu.pipeline_mode<synchronous>, transform_indices = @transform_2, window_bounds = array<i64: 1, 128>}, {pipeline_mode = #tpu.pipeline_mode<synchronous>, transform_indices = @transform_3, window_bounds = array<i64: 128, 16>}, {pipeline_mode = #tpu.pipeline_mode<synchronous>, transform_indices = @transform_4, window_bounds = array<i64: 1, 16>}, {transform_indices = @transform_5, window_bounds = array<i64: 8, 16>}]} {
    %c0 = arith.constant 0 : index
    %c0_0 = arith.constant 0 : index
    %0 = vector.load %arg1[%c0, %c0_0] : memref<8x32xf32, #tpu.memory_space<vmem>>, vector<8x32xf32>
    %c0_1 = arith.constant 0 : index
    %c0_2 = arith.constant 0 : index
    %1 = vector.load %arg2[%c0_1, %c0_2] : memref<32x128xf32, #tpu.memory_space<vmem>>, vector<32x128xf32>
    %cst = arith.constant dense<0.000000e+00> : vector<8x128xf32>
    %2 = tpu.matmul %0, %1, %cst {dimension_numbers = #tpu.dot_dimension_numbers<[1], [0], [0], [1], [0, 0, 1, 1], [], []>} : vector<8x32xf32>, vector<32x128xf32>, vector<8x128xf32> -> vector<8x128xf32>
    %c0_3 = arith.constant 0 : index
    %c0_4 = arith.constant 0 : index
    %3 = vector.load %arg3[%c0_3, %c0_4] : memref<1x128xf32, #tpu.memory_space<vmem>>, vector<1x128xf32>
    %4 = vector.broadcast %3 : vector<1x128xf32> to vector<8x128xf32>
    %5 = arith.addf %2, %4 : vector<8x128xf32>
    %cst_5 = arith.constant 0.000000e+00 : f32
    %6 = vector.broadcast %cst_5 : f32 to vector<8x128xf32>
    %7 = arith.maximumf %5, %6 : vector<8x128xf32>
    %c0_6 = arith.constant 0 : index
    %c0_7 = arith.constant 0 : index
    %8 = vector.load %arg4[%c0_6, %c0_7] : memref<128x16xf32, #tpu.memory_space<vmem>>, vector<128x16xf32>
    %cst_8 = arith.constant dense<0.000000e+00> : vector<8x16xf32>
    %9 = tpu.matmul %7, %8, %cst_8 {dimension_numbers = #tpu.dot_dimension_numbers<[1], [0], [0], [1], [0, 0, 1, 1], [], []>} : vector<8x128xf32>, vector<128x16xf32>, vector<8x16xf32> -> vector<8x16xf32>
    %c0_9 = arith.constant 0 : index
    %c0_10 = arith.constant 0 : index
    %10 = vector.load %arg5[%c0_9, %c0_10] : memref<1x16xf32, #tpu.memory_space<vmem>>, vector<1x16xf32>
    %11 = vector.broadcast %10 : vector<1x16xf32> to vector<8x16xf32>
    %12 = arith.addf %9, %11 : vector<8x16xf32>
    %c0_11 = arith.constant 0 : index
    %c0_12 = arith.constant 0 : index
    %13 = vector.load %arg6[%c0_11, %c0_12] : memref<8x16xf32, #tpu.memory_space<vmem>>, vector<8x16xf32>
    tpu.vector_store %arg6[%c0_11, %c0_12], %12 {strides = array<i32>} : memref<8x16xf32, #tpu.memory_space<vmem>>, vector<8x16xf32>,
    return
  }
  func.func @transform_0(%arg0: i32) -> (i32, i32) {
    %c0_i32 = arith.constant 0 : i32
    %c0_i32_0 = arith.constant 0 : i32
    return %arg0, %c0_i32 : i32, i32
  }
  func.func @transform_1(%arg0: i32) -> (i32, i32) {
    %c0_i32 = arith.constant 0 : i32
    %c0_i32_0 = arith.constant 0 : i32
    %c0_i32_1 = arith.constant 0 : i32
    return %c0_i32, %c0_i32_0 : i32, i32
  }
  func.func @transform_2(%arg0: i32) -> (i32, i32) {
    %c0_i32 = arith.constant 0 : i32
    %c0_i32_0 = arith.constant 0 : i32
    %c0_i32_1 = arith.constant 0 : i32
    return %c0_i32, %c0_i32_0 : i32, i32
  }
  func.func @transform_3(%arg0: i32) -> (i32, i32) {
    %c0_i32 = arith.constant 0 : i32
    %c0_i32_0 = arith.constant 0 : i32
    %c0_i32_1 = arith.constant 0 : i32
    return %c0_i32, %c0_i32_0 : i32, i32
  }
  func.func @transform_4(%arg0: i32) -> (i32, i32) {
    %c0_i32 = arith.constant 0 : i32
    %c0_i32_0 = arith.constant 0 : i32
    %c0_i32_1 = arith.constant 0 : i32
    return %c0_i32, %c0_i32_0 : i32, i32
  }
  func.func @transform_5(%arg0: i32) -> (i32, i32) {
    %c0_i32 = arith.constant 0 : i32
    %c0_i32_0 = arith.constant 0 : i32
    return %arg0, %c0_i32 : i32, i32
  }
}

</mosaic_0001>

<llo_original>
// kernel: tpu_custom_call.1
$region0: #{tpu_custom_call.1}
  #allocation0 [shape = 'u32[]', space=smem, size = 0x4, offset = 0x4, fixed_abs, tag = 'smem constant byte address 0x4 - core index']
  #allocation1 [shape = 'u32[144,128]{1,0:T(1,128)}', space=vmem, size = 0x12000, scoped, tag = 'internal scratch']
  %s0 = inlined_call_operand.vmem [shape: f32[8,32], index: 0, kind: input, shape index: {}]
  %s1 = inlined_call_operand.vmem [shape: f32[32,128], index: 1, kind: input, shape index: {}]
  %s2 = inlined_call_operand.vmem [shape: f32[1,128], index: 2, kind: input, shape index: {}]
  %s3 = inlined_call_operand.vmem [shape: f32[128,16], index: 3, kind: input, shape index: {}]
  %s4 = inlined_call_operand.vmem [shape: f32[1,16], index: 4, kind: input, shape index: {}]
  %s5 = inlined_call_operand.hbm [shape: f32[8,16], index: 5, kind: output, shape index: {}]
  %s6 = sld [smem:[#allocation0]]
  $region30: #{tpu_custom_call.1} parent=0
    _
  %s8 = ssub.s32 1, %s6
  %s9 = scalar_select 0, %s8, %s6
  $region1: #{tpu_custom_call.1} parent=0
    #allocation2 [shape = 'u8[4096]{0}', space=vmem, size = 0x1000, scoped, tag = 'output window, operand 0, single buffered']
    #allocation3 [shape = 's32[1]{0}', space=sflag, size = 0x4, scoped, tag = 'scoped memory for tpu_custom_call.1']
    %10 = vsyncpa [#allocation3], 0
    // Predicated region
    $region2: #{tpu_custom_call.1} parent=1 // pred_check
      _
    $region3: #{tpu_custom_call.1} parent=1 // pred_check_branch
      %12 = sbr.rel (0) target = $region5
    $region4: #{tpu_custom_call.1} parent=1 // pred_region
      _
    $region5: #{tpu_custom_call.1} parent=1 // pred_fallthru
      _
    // Predicated region
    $region6: #{tpu_custom_call.1} parent=1 // pred_check
      _
    $region7: #{tpu_custom_call.1} parent=1 // pred_check_branch
      %14 = sbr.rel (0) target = $region9
    $region8: #{tpu_custom_call.1} parent=1 // pred_region
      _
    $region9: #{tpu_custom_call.1} parent=1 // pred_fallthru
      _
    // Predicated region
    $region10: #{tpu_custom_call.1} parent=1 // pred_check
      _
    $region11: #{tpu_custom_call.1} parent=1 // pred_check_branch
      %16 = sbr.rel (0) target = $region13
    $region12: #{tpu_custom_call.1} parent=1 // pred_region
      _
    $region13: #{tpu_custom_call.1} parent=1 // pred_fallthru
      _
    // Predicated region
    $region14: #{tpu_custom_call.1} parent=1 // pred_check
      _
    $region15: #{tpu_custom_call.1} parent=1 // pred_check_branch
      %18 = sbr.rel (0) target = $region17
    $region16: #{tpu_custom_call.1} parent=1 // pred_region
      _
    $region17: #{tpu_custom_call.1} parent=1 // pred_fallthru
      _
    // Predicated region
    $region18: #{tpu_custom_call.1} parent=1 // pred_check
      _
    $region19: #{tpu_custom_call.1} parent=1 // pred_check_branch
      %20 = sbr.rel (0) target = $region21
    $region20: #{tpu_custom_call.1} parent=1 // pred_region
      _
    $region21: #{tpu_custom_call.1} parent=1 // pred_fallthru
      _
    %v21 = vld [vmem:[%s0] sm:$0xff]
    %v22 = vld [vmem:[%s1] sm:$0xff]
    %v23 = vld [vmem:[%s1 + $0x8] sm:$0xff]
    %v24 = vld [vmem:[%s1 + $0x10] sm:$0xff]
    %v25 = vld [vmem:[%s1 + $0x18] sm:$0xff]
    %v26 = vld [vmem:[%s2] sm:$0x1]
    %v28 = vlaneseq
    %v29 = vshrl.u32 %v28, 7
    %v30 = vsub.s32 0, %v29
    %v31 = vrot.slane %v26, %v30
    %vm33 = vcmask 261120
    %v35 = vsel %vm33, %v21, 0
    %37 = vmatprep.subr.mxu0 0.0
    %38 = vmatpush1.msra.mxu0 %v22
    %39 = vmatprep.subr.mxu0 0.0
    %40 = vmatpush1.msra.mxu0 %v23
    %41 = vmatprep.subr.mxu0 0.0
    %42 = vmatpush1.msra.mxu0 %v24
    %43 = vmatprep.subr.mxu0 0.0
    %44 = vmatpush1.msra.mxu0 %v25
    %45 = vmatprep.subr.mxu0 0.0
    %46 = vmatpush1.msra.mxu0 0.0
    %47 = vmatprep.subr.mxu0 0.0
    %48 = vmatpush1.msra.mxu0 0.0
    %49 = vmatprep.subr.mxu0 0.0
    %50 = vmatpush1.msra.mxu0 0.0
    %51 = vmatprep.subr.mxu0 0.0
    %52 = vmatpush1.msra.mxu0 0.0
    %53 = vmatprep.subr.mxu0 0.0
    %54 = vmatpush1.msra.mxu0 0.0
    %55 = vmatprep.subr.mxu0 0.0
    %56 = vmatpush1.msra.mxu0 0.0
    %57 = vmatprep.subr.mxu0 0.0
    %58 = vmatpush1.msra.mxu0 0.0
    %59 = vmatprep.subr.mxu0 0.0
    %60 = vmatpush1.msra.mxu0 0.0
    %61 = vmatprep.subr.mxu0 0.0
    %62 = vmatpush1.msra.mxu0 0.0
    %63 = vmatprep.subr.mxu0 0.0
    %64 = vmatpush1.msra.mxu0 0.0
    %65 = vmatprep.subr.mxu0 0.0
    %66 = vmatpush1.msra.mxu0 0.0
    %67 = vmatprep.subr.mxu0 0.0
    %68 = vmatpush1.msra.mxu0 0.0
    %69 = vmatprep.subr.mxu0 0.0
    %70 = vmatpush1.msra.mxu0 0.0
    %71 = vmatprep.subr.mxu0 0.0
    %72 = vmatpush1.msra.mxu0 0.0
    %73 = vmatprep.subr.mxu0 0.0
    %74 = vmatpush1.msra.mxu0 0.0
    %75 = vmatprep.subr.mxu0 0.0
    %76 = vmatpush1.msra.mxu0 0.0
    %77 = vmatprep.subr.mxu0 0.0
    %78 = vmatpush1.msra.mxu0 0.0
    %79 = vmatprep.subr.mxu0 0.0
    %80 = vmatpush1.msra.mxu0 0.0
    %81 = vmatprep.subr.mxu0 0.0
    %82 = vmatpush1.msra.mxu0 0.0
    %83 = vmatprep.subr.mxu0 0.0
    %84 = vmatpush1.msra.mxu0 0.0
    %85 = vmatprep.subr.mxu0 0.0
    %86 = vmatpush1.msra.mxu0 0.0
    %87 = vmatprep.subr.mxu0 0.0
    %88 = vmatpush1.msra.mxu0 0.0
    %89 = vmatprep.subr.mxu0 0.0
    %90 = vmatpush1.msra.mxu0 0.0
    %91 = vmatprep.subr.mxu0 0.0
    %92 = vmatpush1.msra.mxu0 0.0
    %93 = vmatprep.subr.mxu0 0.0
    %94 = vmatpush1.msra.mxu0 0.0
    %95 = vmatprep.subr.mxu0 0.0
    %96 = vmatpush1.msra.mxu0 0.0
    %97 = vmatprep.subr.mxu0 0.0
    %98 = vmatpush1.msra.mxu0 0.0
    %99 = vmatprep.subr.mxu0 0.0
    %100 = vmatpush1.msra.mxu0 0.0
    %101 = vmatprep.mubr.f32.mxu0 0.0
    %102 = vmatmul.mubr.f32.gmra.mrb[0].mxu0 %v35
    %v103 = vpop.f32.mrb[0].mxu0
    %v104 = vadd.f32 %v31, %v103
    %v105 = vpop.f32.mrb[0].mxu0
    %106 = vdwg.mxu0
    %v107 = vmax.f32 %v104, 0.0
    %v108 = vld [vmem:[%s3] sm:$0xff]
    %v109 = vld [vmem:[%s3 + $0x8] sm:$0xff]
    %v110 = vld [vmem:[%s3 + $0x10] sm:$0xff]
    %v111 = vld [vmem:[%s3 + $0x18] sm:$0xff]
    %v112 = vld [vmem:[%s3 + $0x20] sm:$0xff]
    %v113 = vld [vmem:[%s3 + $0x28] sm:$0xff]
    %v114 = vld [vmem:[%s3 + $0x30] sm:$0xff]
    %v115 = vld [vmem:[%s3 + $0x38] sm:$0xff]
    %v116 = vld [vmem:[%s3 + $0x40] sm:$0xff]
    %v117 = vld [vmem:[%s3 + $0x48] sm:$0xff]
    %v118 = vld [vmem:[%s3 + $0x50] sm:$0xff]
    %v119 = vld [vmem:[%s3 + $0x58] sm:$0xff]
    %v120 = vld [vmem:[%s3 + $0x60] sm:$0xff]
    %v121 = vld [vmem:[%s3 + $0x68] sm:$0xff]
    %v122 = vld [vmem:[%s3 + $0x70] sm:$0xff]
    %v123 = vld [vmem:[%s3 + $0x78] sm:$0xff]
    %v124 = vld [vmem:[%s4] sm:$0x1]
    %v126 = vlaneseq
    %v127 = vshrl.u32 %v126, 7
    %v128 = vsub.s32 0, %v127
    %v129 = vrot.slane %v124, %v128
    %131 = vmatprep.subr.mxu0 0.0
    %132 = vmatpush1.msra.mxu0 %v108
    %133 = vmatprep.subr.mxu0 0.0
    %134 = vmatpush1.msra.mxu0 %v109
    %135 = vmatprep.subr.mxu0 0.0
    %136 = vmatpush1.msra.mxu0 %v110
    %137 = vmatprep.subr.mxu0 0.0
    %138 = vmatpush1.msra.mxu0 %v111
    %139 = vmatprep.subr.mxu0 0.0
    %140 = vmatpush1.msra.mxu0 %v112
    %141 = vmatprep.subr.mxu0 0.0
    %142 = vmatpush1.msra.mxu0 %v113
    %143 = vmatprep.subr.mxu0 0.0
    %144 = vmatpush1.msra.mxu0 %v114
    %145 = vmatprep.subr.mxu0 0.0
    %146 = vmatpush1.msra.mxu0 %v115
    %147 = vmatprep.subr.mxu0 0.0
    %148 = vmatpush1.msra.mxu0 %v116
    %149 = vmatprep.subr.mxu0 0.0
    %150 = vmatpush1.msra.mxu0 %v117
    %151 = vmatprep.subr.mxu0 0.0
    %152 = vmatpush1.msra.mxu0 %v118
    %153 = vmatprep.subr.mxu0 0.0
    %154 = vmatpush1.msra.mxu0 %v119
    %155 = vmatprep.subr.mxu0 0.0
    %156 = vmatpush1.msra.mxu0 %v120
    %157 = vmatprep.subr.mxu0 0.0
    %158 = vmatpush1.msra.mxu0 %v121
    %159 = vmatprep.subr.mxu0 0.0
    %160 = vmatpush1.msra.mxu0 %v122
    %161 = vmatprep.subr.mxu0 0.0
    %162 = vmatpush1.msra.mxu0 %v123
    %163 = vmatprep.subr.mxu0 0.0
    %164 = vmatpush1.msra.mxu0 0.0
    %165 = vmatprep.subr.mxu0 0.0
    %166 = vmatpush1.msra.mxu0 0.0
    %167 = vmatprep.subr.mxu0 0.0
    %168 = vmatpush1.msra.mxu0 0.0
    %169 = vmatprep.subr.mxu0 0.0
    %170 = vmatpush1.msra.mxu0 0.0
    %171 = vmatprep.subr.mxu0 0.0
    %172 = vmatpush1.msra.mxu0 0.0
    %173 = vmatprep.subr.mxu0 0.0
    %174 = vmatpush1.msra.mxu0 0.0
    %175 = vmatprep.subr.mxu0 0.0
    %176 = vmatpush1.msra.mxu0 0.0
    %177 = vmatprep.subr.mxu0 0.0
    %178 = vmatpush1.msra.mxu0 0.0
    %179 = vmatprep.subr.mxu0 0.0
    %180 = vmatpush1.msra.mxu0 0.0
    %181 = vmatprep.subr.mxu0 0.0
    %182 = vmatpush1.msra.mxu0 0.0
    %183 = vmatprep.subr.mxu0 0.0
    %184 = vmatpush1.msra.mxu0 0.0
    %185 = vmatprep.subr.mxu0 0.0
    %186 = vmatpush1.msra.mxu0 0.0
    %187 = vmatprep.subr.mxu0 0.0
    %188 = vmatpush1.msra.mxu0 0.0
    %189 = vmatprep.subr.mxu0 0.0
    %190 = vmatpush1.msra.mxu0 0.0
    %191 = vmatprep.subr.mxu0 0.0
    %192 = vmatpush1.msra.mxu0 0.0
    %193 = vmatprep.subr.mxu0 0.0
    %194 = vmatpush1.msra.mxu0 0.0
    %195 = vmatprep.mubr.f32.mxu0 0.0
    %196 = vmatmul.mubr.f32.gmra.mrb[0].mxu0 %v107
    %v197 = vpop.f32.mrb[0].mxu0
    %v198 = vadd.f32 %v129, %v197
    %v199 = vpop.f32.mrb[0].mxu0
    %200 = vdwg.mxu0
    %vm201 = vcmask 130048
    %202 = vst.msk [vmem:[#allocation2] sm:$0xff] %vm201, %v198
    // Predicated region
    $region22: #{tpu_custom_call.1} parent=1 // pred_check
      _
    $region23: #{tpu_custom_call.1} parent=1 // pred_check_branch
      %204 = sbr.rel (0) target = $region25
    $region24: #{tpu_custom_call.1} parent=1 // pred_region
      %s206 = ssub.s32 128, 128
      %207 = vsyncadd [#allocation3], %s206
      %s209 = sshll.u32 [#allocation2], 4
      %s210 = int_to_ptr.vmem [resolvable:$true] %s209
      %212 = dma.vmem_to_hbm [thread:$0]  %s210, 128, %s5, [#allocation3]
    $region25: #{tpu_custom_call.1} parent=1 // pred_fallthru
      _
    // Predicated region
    $region26: #{tpu_custom_call.1} parent=1 // pred_check
      _
    $region27: #{tpu_custom_call.1} parent=1 // pred_check_branch
      %214 = sbr.rel (0) target = $region29
    $region28: #{tpu_custom_call.1} parent=1 // pred_region
      %215 = dma.done [#allocation3], 128
    $region29: #{tpu_custom_call.1} parent=1 // pred_fallthru
      _
    %216 = vsyncpa [#allocation3], 1

// kernel: tpu_custom_call.1
$region0: #{tpu_custom_call.1}
  #allocation0 [shape = 'u32[]', space=smem, size = 0x4, offset = 0x4, fixed_abs, tag = 'smem constant byte address 0x4 - core index']
  #allocation1 [shape = 'u32[144,128]{1,0:T(1,128)}', space=vmem, size = 0x12000, scoped, tag = 'internal scratch']
  %s0 = inlined_call_operand.vmem [shape: f32[8,32], index: 0, kind: input, shape index: {}]
  %s1 = inlined_call_operand.vmem [shape: f32[32,128], index: 1, kind: input, shape index: {}]
  %s2 = inlined_call_operand.vmem [shape: f32[1,128], index: 2, kind: input, shape index: {}]
  %s3 = inlined_call_operand.vmem [shape: f32[128,16], index: 3, kind: input, shape index: {}]
  %s4 = inlined_call_operand.vmem [shape: f32[1,16], index: 4, kind: input, shape index: {}]
  %s5 = inlined_call_operand.hbm [shape: f32[8,16], index: 5, kind: output, shape index: {}]
  %s6 = sld [smem:[#allocation0]]
  $region30: #{tpu_custom_call.1} parent=0
    _
  %s8 = ssub.s32 1, %s6
  %s9 = scalar_select 0, %s8, %s6
  $region1: #{tpu_custom_call.1} parent=0
    #allocation2 [shape = 'u8[4096]{0}', space=vmem, size = 0x1000, scoped, tag = 'output window, operand 0, single buffered']
    #allocation3 [shape = 's32[1]{0}', space=sflag, size = 0x4, scoped, tag = 'scoped memory for tpu_custom_call.1']
    %10 = vsyncpa [#allocation3], 0
    // Predicated region
    $region2: #{tpu_custom_call.1} parent=1 // pred_check
      _
    $region3: #{tpu_custom_call.1} parent=1 // pred_check_branch
      %12 = sbr.rel (0) target = $region5
    $region4: #{tpu_custom_call.1} parent=1 // pred_region
      _
    $region5: #{tpu_custom_call.1} parent=1 // pred_fallthru
      _
    // Predicated region
    $region6: #{tpu_custom_call.1} parent=1 // pred_check
      _
    $region7: #{tpu_custom_call.1} parent=1 // pred_check_branch
      %14 = sbr.rel (0) target = $region9
    $region8: #{tpu_custom_call.1} parent=1 // pred_region
      _
    $region9: #{tpu_custom_call.1} parent=1 // pred_fallthru
      _
    // Predicated region
    $region10: #{tpu_custom_call.1} parent=1 // pred_check
      _
    $region11: #{tpu_custom_call.1} parent=1 // pred_check_branch
      %16 = sbr.rel (0) target = $region13
    $region12: #{tpu_custom_call.1} parent=1 // pred_region
      _
    $region13: #{tpu_custom_call.1} parent=1 // pred_fallthru
      _
    // Predicated region
    $region14: #{tpu_custom_call.1} parent=1 // pred_check
      _
    $region15: #{tpu_custom_call.1} parent=1 // pred_check_branch
      %18 = sbr.rel (0) target = $region17
    $region16: #{tpu_custom_call.1} parent=1 // pred_region
      _
    $region17: #{tpu_custom_call.1} parent=1 // pred_fallthru
      _
    // Predicated region
    $region18: #{tpu_custom_call.1} parent=1 // pred_check
      _
    $region19: #{tpu_custom_call.1} parent=1 // pred_check_branch
      %20 = sbr.rel (0) target = $region21
    $region20: #{tpu_custom_call.1} parent=1 // pred_region
      _
    $region21: #{tpu_custom_call.1} parent=1 // pred_fallthru
      _
    %v21 = vld [vmem:[%s0] sm:$0xff]
    %v22 = vld [vmem:[%s1] sm:$0xff]
    %v23 = vld [vmem:[%s1 + $0x8] sm:$0xff]
    %v24 = vld [vmem:[%s1 + $0x10] sm:$0xff]
    %v25 = vld [vmem:[%s1 + $0x18] sm:$0xff]
    %v26 = vld [vmem:[%s2] sm:$0x1]
    %v28 = vlaneseq
    %v29 = vshrl.u32 %v28, 7
    %v30 = vsub.s32 0, %v29
    %v31 = vrot.slane %v26, %v30
    %vm33 = vcmask 261120
    %v35 = vsel %vm33, %v21, 0
    %37 = vmatprep.subr.mxu0 0.0
    %38 = vmatpush1.msra.mxu0 %v22
    %39 = vmatprep.subr.mxu0 0.0
    %40 = vmatpush1.msra.mxu0 %v23
    %41 = vmatprep.subr.mxu0 0.0
    %42 = vmatpush1.msra.mxu0 %v24
    %43 = vmatprep.subr.mxu0 0.0
    %44 = vmatpush1.msra.mxu0 %v25
    %45 = vmatprep.subr.mxu0 0.0
    %46 = vmatpush1.msra.mxu0 0.0
    %47 = vmatprep.subr.mxu0 0.0
    %48 = vmatpush1.msra.mxu0 0.0
    %49 = vmatprep.subr.mxu0 0.0
    %50 = vmatpush1.msra.mxu0 0.0
    %51 = vmatprep.subr.mxu0 0.0
    %52 = vmatpush1.msra.mxu0 0.0
    %53 = vmatprep.subr.mxu0 0.0
    %54 = vmatpush1.msra.mxu0 0.0
    %55 = vmatprep.subr.mxu0 0.0
    %56 = vmatpush1.msra.mxu0 0.0
    %57 = vmatprep.subr.mxu0 0.0
    %58 = vmatpush1.msra.mxu0 0.0
    %59 = vmatprep.subr.mxu0 0.0
    %60 = vmatpush1.msra.mxu0 0.0
    %61 = vmatprep.subr.mxu0 0.0
    %62 = vmatpush1.msra.mxu0 0.0
    %63 = vmatprep.subr.mxu0 0.0
    %64 = vmatpush1.msra.mxu0 0.0
    %65 = vmatprep.subr.mxu0 0.0
    %66 = vmatpush1.msra.mxu0 0.0
    %67 = vmatprep.subr.mxu0 0.0
    %68 = vmatpush1.msra.mxu0 0.0
    %69 = vmatprep.subr.mxu0 0.0
    %70 = vmatpush1.msra.mxu0 0.0
    %71 = vmatprep.subr.mxu0 0.0
    %72 = vmatpush1.msra.mxu0 0.0
    %73 = vmatprep.subr.mxu0 0.0
    %74 = vmatpush1.msra.mxu0 0.0
    %75 = vmatprep.subr.mxu0 0.0
    %76 = vmatpush1.msra.mxu0 0.0
    %77 = vmatprep.subr.mxu0 0.0
    %78 = vmatpush1.msra.mxu0 0.0
    %79 = vmatprep.subr.mxu0 0.0
    %80 = vmatpush1.msra.mxu0 0.0
    %81 = vmatprep.subr.mxu0 0.0
    %82 = vmatpush1.msra.mxu0 0.0
    %83 = vmatprep.subr.mxu0 0.0
    %84 = vmatpush1.msra.mxu0 0.0
    %85 = vmatprep.subr.mxu0 0.0
    %86 = vmatpush1.msra.mxu0 0.0
    %87 = vmatprep.subr.mxu0 0.0
    %88 = vmatpush1.msra.mxu0 0.0
    %89 = vmatprep.subr.mxu0 0.0
    %90 = vmatpush1.msra.mxu0 0.0
    %91 = vmatprep.subr.mxu0 0.0
    %92 = vmatpush1.msra.mxu0 0.0
    %93 = vmatprep.subr.mxu0 0.0
    %94 = vmatpush1.msra.mxu0 0.0
    %95 = vmatprep.subr.mxu0 0.0
    %96 = vmatpush1.msra.mxu0 0.0
    %97 = vmatprep.subr.mxu0 0.0
    %98 = vmatpush1.msra.mxu0 0.0
    %99 = vmatprep.subr.mxu0 0.0
    %100 = vmatpush1.msra.mxu0 0.0
    %101 = vmatprep.mubr.f32.mxu0 0.0
    %102 = vmatmul.mubr.f32.gmra.mrb[0].mxu0 %v35
    %v103 = vpop.f32.mrb[0].mxu0
    %v104 = vadd.f32 %v31, %v103
    %v105 = vpop.f32.mrb[0].mxu0
    %106 = vdwg.mxu0
    %v107 = vmax.f32 %v104, 0.0
    %v108 = vld [vmem:[%s3] sm:$0xff]
    %v109 = vld [vmem:[%s3 + $0x8] sm:$0xff]
    %v110 = vld [vmem:[%s3 + $0x10] sm:$0xff]
    %v111 = vld [vmem:[%s3 + $0x18] sm:$0xff]
    %v112 = vld [vmem:[%s3 + $0x20] sm:$0xff]
    %v113 = vld [vmem:[%s3 + $0x28] sm:$0xff]
    %v114 = vld [vmem:[%s3 + $0x30] sm:$0xff]
    %v115 = vld [vmem:[%s3 + $0x38] sm:$0xff]
    %v116 = vld [vmem:[%s3 + $0x40] sm:$0xff]
    %v117 = vld [vmem:[%s3 + $0x48] sm:$0xff]
    %v118 = vld [vmem:[%s3 + $0x50] sm:$0xff]
    %v119 = vld [vmem:[%s3 + $0x58] sm:$0xff]
    %v120 = vld [vmem:[%s3 + $0x60] sm:$0xff]
    %v121 = vld [vmem:[%s3 + $0x68] sm:$0xff]
    %v122 = vld [vmem:[%s3 + $0x70] sm:$0xff]
    %v123 = vld [vmem:[%s3 + $0x78] sm:$0xff]
    %v124 = vld [vmem:[%s4] sm:$0x1]
    %v126 = vlaneseq
    %v127 = vshrl.u32 %v126, 7
    %v128 = vsub.s32 0, %v127
    %v129 = vrot.slane %v124, %v128
    %131 = vmatprep.subr.mxu0 0.0
    %132 = vmatpush1.msra.mxu0 %v108
    %133 = vmatprep.subr.mxu0 0.0
    %134 = vmatpush1.msra.mxu0 %v109
    %135 = vmatprep.subr.mxu0 0.0
    %136 = vmatpush1.msra.mxu0 %v110
    %137 = vmatprep.subr.mxu0 0.0
    %138 = vmatpush1.msra.mxu0 %v111
    %139 = vmatprep.subr.mxu0 0.0
    %140 = vmatpush1.msra.mxu0 %v112
    %141 = vmatprep.subr.mxu0 0.0
    %142 = vmatpush1.msra.mxu0 %v113
    %143 = vmatprep.subr.mxu0 0.0
    %144 = vmatpush1.msra.mxu0 %v114
    %145 = vmatprep.subr.mxu0 0.0
    %146 = vmatpush1.msra.mxu0 %v115
    %147 = vmatprep.subr.mxu0 0.0
    %148 = vmatpush1.msra.mxu0 %v116
    %149 = vmatprep.subr.mxu0 0.0
    %150 = vmatpush1.msra.mxu0 %v117
    %151 = vmatprep.subr.mxu0 0.0
    %152 = vmatpush1.msra.mxu0 %v118
    %153 = vmatprep.subr.mxu0 0.0
    %154 = vmatpush1.msra.mxu0 %v119
    %155 = vmatprep.subr.mxu0 0.0
    %156 = vmatpush1.msra.mxu0 %v120
    %157 = vmatprep.subr.mxu0 0.0
    %158 = vmatpush1.msra.mxu0 %v121
    %159 = vmatprep.subr.mxu0 0.0
    %160 = vmatpush1.msra.mxu0 %v122
    %161 = vmatprep.subr.mxu0 0.0
    %162 = vmatpush1.msra.mxu0 %v123
    %163 = vmatprep.subr.mxu0 0.0
    %164 = vmatpush1.msra.mxu0 0.0
    %165 = vmatprep.subr.mxu0 0.0
    %166 = vmatpush1.msra.mxu0 0.0
    %167 = vmatprep.subr.mxu0 0.0
    %168 = vmatpush1.msra.mxu0 0.0
    %169 = vmatprep.subr.mxu0 0.0
    %170 = vmatpush1.msra.mxu0 0.0
    %171 = vmatprep.subr.mxu0 0.0
    %172 = vmatpush1.msra.mxu0 0.0
    %173 = vmatprep.subr.mxu0 0.0
    %174 = vmatpush1.msra.mxu0 0.0
    %175 = vmatprep.subr.mxu0 0.0
    %176 = vmatpush1.msra.mxu0 0.0
    %177 = vmatprep.subr.mxu0 0.0
    %178 = vmatpush1.msra.mxu0 0.0
    %179 = vmatprep.subr.mxu0 0.0
    %180 = vmatpush1.msra.mxu0 0.0
    %181 = vmatprep.subr.mxu0 0.0
    %182 = vmatpush1.msra.mxu0 0.0
    %183 = vmatprep.subr.mxu0 0.0
    %184 = vmatpush1.msra.mxu0 0.0
    %185 = vmatprep.subr.mxu0 0.0
    %186 = vmatpush1.msra.mxu0 0.0
    %187 = vmatprep.subr.mxu0 0.0
    %188 = vmatpush1.msra.mxu0 0.0
    %189 = vmatprep.subr.mxu0 0.0
    %190 = vmatpush1.msra.mxu0 0.0
    %191 = vmatprep.subr.mxu0 0.0
    %192 = vmatpush1.msra.mxu0 0.0
    %193 = vmatprep.subr.mxu0 0.0
    %194 = vmatpush1.msra.mxu0 0.0
    %195 = vmatprep.mubr.f32.mxu0 0.0
    %196 = vmatmul.mubr.f32.gmra.mrb[0].mxu0 %v107
    %v197 = vpop.f32.mrb[0].mxu0
    %v198 = vadd.f32 %v129, %v197
    %v199 = vpop.f32.mrb[0].mxu0
    %200 = vdwg.mxu0
    %vm201 = vcmask 130048
    %202 = vst.msk [vmem:[#allocation2] sm:$0xff] %vm201, %v198
    // Predicated region
    $region22: #{tpu_custom_call.1} parent=1 // pred_check
      _
    $region23: #{tpu_custom_call.1} parent=1 // pred_check_branch
      %204 = sbr.rel (0) target = $region25
    $region24: #{tpu_custom_call.1} parent=1 // pred_region
      %s206 = ssub.s32 128, 128
      %207 = vsyncadd [#allocation3], %s206
      %s209 = sshll.u32 [#allocation2], 4
      %s210 = int_to_ptr.vmem [resolvable:$true] %s209
      %212 = dma.vmem_to_hbm [thread:$0]  %s210, 128, %s5, [#allocation3]
    $region25: #{tpu_custom_call.1} parent=1 // pred_fallthru
      _
    // Predicated region
    $region26: #{tpu_custom_call.1} parent=1 // pred_check
      _
    $region27: #{tpu_custom_call.1} parent=1 // pred_check_branch
      %214 = sbr.rel (0) target = $region29
    $region28: #{tpu_custom_call.1} parent=1 // pred_region
      %215 = dma.done [#allocation3], 128
    $region29: #{tpu_custom_call.1} parent=1 // pred_fallthru
      _
    %216 = vsyncpa [#allocation3], 1

</llo_original>
